<compile_context>
chip_gen: v5e
topology: v5e:2x2
jax: 0.10.0
libtpu: 0.0.40
codegen_flags: <defaults>
</compile_context>

<pallas_src>
import functools

import jax
import jax.numpy as jnp
from jax import lax
from jax.experimental import pallas as pl
from jax.experimental.pallas import tpu as pltpu


# Defaults (overridable).  Multiples of 128 keep MXU occupancy high and the
# Gram-output blocks lane-dense; tn=512 also matches the 256-wide MXU of
# v6e/v7x.  f32 worst case at these tiles: 2 ops x 2 bufs x (512x2048x4B)
# = 16 MiB + 1 MiB accumulator + 2 MiB target blocks ~= 19 MiB, well inside
# the 48 MiB scoped budget on every generation (v5e/v6e 128 MiB physical,
# v7x 64 MiB).  v5e/v6e users can raise the limit toward 96 MiB for even
# larger f32 tiles; v7x should stay <= ~48 MiB.
_TN = 512
_TK = 2048
_VMEM_LIMIT_BYTES = 48 * 1024 * 1024


def _round_up(x, m):
    return ((x + m - 1) // m) * m


def _pick_tile(dim, preferred, align=128):
    """Largest multiple of `align` dividing `dim` (a multiple of align) <= preferred."""
    if dim <= preferred:
        return dim
    t = max(align, (preferred // align) * align)
    while t > align and dim % t != 0:
        t -= align
    return t


def _to_feat(x):
    b, c, h, w = x.shape
    # Matches torch `x.view(b*h, w*c)` on a contiguous NCHW tensor.
    feat = jnp.reshape(x, (b * h, w * c))
    den = float(b * c * h * w)
    return feat, den


def _pad2d(a, n_pad, m_pad):
    n, m = a.shape
    if n == n_pad and m == m_pad:
        return a
    return jnp.pad(a, ((0, n_pad - n), (0, m_pad - m)))


def _upper_pairs(nb):
    """Upper-triangular (i <= j) block-pair tables (exploit Gram symmetry)."""
    pairs = [(i, j) for i in range(nb) for j in range(i, nb)]
    bi = jnp.asarray([p[0] for p in pairs], dtype=jnp.int32)
    bj = jnp.asarray([p[1] for p in pairs], dtype=jnp.int32)
    return pairs, bi, bj


# ----------------------------- Pallas kernels ------------------------------

def _gram_kernel(bi_ref, bj_ref, fi_ref, fj_ref, out_ref, acc_ref, *, inv_den):
    """One upper-triangular (tn, tn) Gram block, accumulated over the k axis."""
    del bi_ref, bj_ref  # only used by the index maps
    k = pl.program_id(1)

    @pl.when(k == 0)
    def _():
        acc_ref[...] = jnp.zeros_like(acc_ref)

    # F_i . F_j^T without materializing a transpose: contract axis 1 of both.
    acc_ref[...] += lax.dot_general(
        fi_ref[...], fj_ref[...],
        dimension_numbers=(((1,), (1,)), ((), ())),
        preferred_element_type=jnp.float32)

    @pl.when(k == pl.num_programs(1) - 1)
    def _():
        out_ref[...] = acc_ref[...] * inv_den


def _style_loss_kernel(bi_ref, bj_ref, fi_ref, fj_ref, tgt_ref, partials_ref,
                       acc_ref, *, inv_den):
    """Fused Gram-block + squared-error partial sum for one block pair."""
    del bi_ref, bj_ref  # only used by the index maps
    p = pl.program_id(0)          # block-pair index
    k = pl.program_id(1)          # contraction (W*C) tile index

    @pl.when(k == 0)
    def _():
        acc_ref[...] = jnp.zeros_like(acc_ref)

    acc_ref[...] += lax.dot_general(
        fi_ref[...], fj_ref[...],
        dimension_numbers=(((1,), (1,)), ((), ())),
        preferred_element_type=jnp.float32)

    @pl.when(k == pl.num_programs(1) - 1)
    def _():
        diff = acc_ref[...] * inv_den - tgt_ref[...]
        # Raw per-pair partial; symmetry weighting + mean happen outside.
        partials_ref[p] = jnp.sum(diff * diff)


# ------------------------------ JAX wrappers --------------------------------

def gram_matrix(x, *, tn=_TN, tk=_TK, matmul_dtype=None):
    """Gram matrix of x (upper-triangular tiled Pallas matmul, f32 accumulation)."""
    feat, den = _to_feat(x)
    n, m = feat.shape
    if matmul_dtype is not None:
        feat = feat.astype(matmul_dtype)        # cast OUTSIDE the kernel
    n_pad, m_pad = _round_up(n, 128), _round_up(m, 128)
    feat = _pad2d(feat, n_pad, m_pad)           # zero rows/cols: exact for Gram
    tn = _pick_tile(n_pad, tn)
    tk = _pick_tile(m_pad, tk)
    nb, nk = n_pad // tn, m_pad // tk
    pairs, bi, bj = _upper_pairs(nb)
    n_pairs = len(pairs)
    itemsize = feat.dtype.itemsize

    cost = pl.CostEstimate(
        flops=int(2 * n_pairs * tn * tn * m_pad),
        transcendentals=0,
        bytes_accessed=int(2 * n_pairs * tn * m_pad * itemsize
                           + n_pairs * tn * tn * 4))

    g = pl.pallas_call(
        functools.partial(_gram_kernel, inv_den=1.0 / den),
        out_shape=jax.ShapeDtypeStruct((n_pad, n_pad), jnp.float32),
        grid_spec=pltpu.PrefetchScalarGridSpec(
            num_scalar_prefetch=2,
            grid=(n_pairs, nk),
            in_specs=[
                pl.BlockSpec((tn, tk), lambda p, k, bi_r, bj_r: (bi_r[p], k)),
                pl.BlockSpec((tn, tk), lambda p, k, bi_r, bj_r: (bj_r[p], k)),
            ],
            out_specs=pl.BlockSpec((tn, tn),
                                   lambda p, k, bi_r, bj_r: (bi_r[p], bj_r[p])),
            scratch_shapes=[pltpu.VMEM((tn, tn), jnp.float32)]),
        compiler_params=pltpu.CompilerParams(
            # Each pair owns its own (bi, bj) output block -> pair axis can be
            # sharded across TensorCores on v7x; k accumulates sequentially.
            dimension_semantics=("parallel", "arbitrary"),
            vmem_limit_bytes=_VMEM_LIMIT_BYTES),
        cost_estimate=cost,
    )(bi, bj, feat, feat)

    if nb > 1:
        # Mirror the never-written strictly-lower-triangular blocks.
        rows = lax.broadcasted_iota(jnp.int32, (n_pad, n_pad), 0) // tn
        cols = lax.broadcasted_iota(jnp.int32, (n_pad, n_pad), 1) // tn
        g = jnp.where(rows <= cols, g, g.T)
    return g[:n, :n]


def style_loss_value(x, target_gram, *, tn=_TN, tk=_TK, matmul_dtype=None):
    """mean((gram_matrix(x) - target_gram)**2), fused in one tiled kernel."""
    feat, den = _to_feat(x)
    n, m = feat.shape
    if matmul_dtype is not None:
        feat = feat.astype(matmul_dtype)        # cast OUTSIDE the kernel
    n_pad, m_pad = _round_up(n, 128), _round_up(m, 128)
    feat = _pad2d(feat, n_pad, m_pad)
    # Zero-padded Gram rows/cols match the zero-padded target -> diff is 0
    # there; the mean below divides by the TRUE n*n, so padding is exact.
    tgt = _pad2d(target_gram.astype(jnp.float32), n_pad, n_pad)
    tn = _pick_tile(n_pad, tn)
    tk = _pick_tile(m_pad, tk)
    nb, nk = n_pad // tn, m_pad // tk
    pairs, bi, bj = _upper_pairs(nb)
    n_pairs = len(pairs)
    itemsize = feat.dtype.itemsize

    cost = pl.CostEstimate(
        flops=int(2 * n_pairs * tn * tn * m_pad),
        transcendentals=0,
        bytes_accessed=int(2 * n_pairs * tn * m_pad * itemsize
                           + n_pairs * tn * tn * 4 + n_pairs * 4))

    partials = pl.pallas_call(
        functools.partial(_style_loss_kernel, inv_den=1.0 / den),
        out_shape=jax.ShapeDtypeStruct((n_pairs,), jnp.float32),
        grid_spec=pltpu.PrefetchScalarGridSpec(
            num_scalar_prefetch=2,
            grid=(n_pairs, nk),
            # NOTE: pipeline_mode=pl.Buffered(3) on the two feature specs is a
            # worthwhile sweep once bf16 halves their VMEM footprint.
            in_specs=[
                pl.BlockSpec((tn, tk), lambda p, k, bi_r, bj_r: (bi_r[p], k)),
                pl.BlockSpec((tn, tk), lambda p, k, bi_r, bj_r: (bj_r[p], k)),
                pl.BlockSpec((tn, tn), lambda p, k, bi_r, bj_r: (bi_r[p], bj_r[p])),
            ],
            out_specs=pl.BlockSpec(memory_space=pltpu.SMEM),
            scratch_shapes=[pltpu.VMEM((tn, tn), jnp.float32)]),
        compiler_params=pltpu.CompilerParams(
            # The per-pair partials live in one unblocked SMEM output, so the
            # pair axis stays sequential to be safe under megacore sharding.
            # TODO(synk): block the partials output along the pair axis so v7x
            # can mark it "parallel" and shard across its two TensorCores.
            dimension_semantics=("arbitrary", "arbitrary"),
            vmem_limit_bytes=_VMEM_LIMIT_BYTES),
        cost_estimate=cost,
    )(bi, bj, feat, feat, tgt)

    # Gram symmetry: each off-diagonal (i < j) block counts twice.
    weights = jnp.asarray([1.0 if i == j else 2.0 for i, j in pairs],
                          dtype=jnp.float32)
    return jnp.sum(partials * weights) / float(n * n)


class StyleLoss:
    """Mirror of the PyTorch StyleLoss module (forward returns x, stores .loss)."""

    def __init__(self, target, *, tn=_TN, tk=_TK, matmul_dtype=None):
        self._tn = tn
        self._tk = tk
        # Set matmul_dtype=jnp.bfloat16 for higher MXU throughput / half the
        # feature DMA on v6e/v7x when the loss tolerance allows; the target
        # Gram itself is always built from f32 features (one-time cost).
        self._matmul_dtype = matmul_dtype
        self.target = lax.stop_gradient(gram_matrix(target, tn=tn, tk=tk))
        self.loss = 0.0

    def __call__(self, x):
        self.loss = style_loss_value(x, self.target, tn=self._tn, tk=self._tk,
                                     matmul_dtype=self._matmul_dtype)
        return x


# ---------------------------------- main -----------------------------------

if __name__ == "__main__":
    def ref_gram(a):
        b, c, h, w = a.shape
        f = jnp.reshape(a, (b * h, w * c))
        g = jnp.dot(f, f.T, precision=lax.Precision.HIGHEST)
        return g / (b * c * h * w)

    def ref_loss(a, t):
        return jnp.mean((ref_gram(a) - ref_gram(t)) ** 2)

    key = jax.random.PRNGKey(0)

    # --- spec-sized shape (exercises the zero-padding path: n=32, m=64) ------
    k_tgt, k_x, key = jax.random.split(key, 3)
    B, C, H, W = 2, 4, 16, 16
    target = jax.random.normal(k_tgt, (B, C, H, W), dtype=jnp.float32)
    x = jax.random.normal(k_x, (B, C, H, W), dtype=jnp.float32)

    module = StyleLoss(target)
    out = module(x)
    jax.block_until_ready(out)
    loss = jax.block_until_ready(module.loss)
    r = ref_loss(x, target)
    assert jnp.allclose(loss, r, rtol=2e-3, atol=1e-9), (loss, r)
    assert jnp.array_equal(out, x)

    g = gram_matrix(x)
    assert jnp.allclose(g, ref_gram(x), rtol=5e-3, atol=5e-5)

    # --- larger shape, tiny tiles purely to exercise multi-block tiling,
    #     k-accumulation, the upper-triangular pair path and the mirror ------
    k_tgt2, k_x2 = jax.random.split(key)
    B2, C2, H2, W2 = 2, 16, 128, 16            # n = B*H = 256, m = W*C = 256
    target2 = jax.random.normal(k_tgt2, (B2, C2, H2, W2), dtype=jnp.float32)
    x2 = jax.random.normal(k_x2, (B2, C2, H2, W2), dtype=jnp.float32)

    module2 = StyleLoss(target2, tn=128, tk=128)   # nb=2 (3 pairs), nk=2
    out2 = module2(x2)
    jax.block_until_ready(out2)
    loss2 = jax.block_until_ready(module2.loss)
    r2 = ref_loss(x2, target2)
    assert jnp.allclose(loss2, r2, rtol=2e-3, atol=1e-10), (loss2, r2)
    assert jnp.array_equal(out2, x2)

    # --- bf16-feature path (wrapper-side cast, f32 accumulation) -------------
    module3 = StyleLoss(target2, tn=128, tk=128, matmul_dtype=jnp.bfloat16)
    out3 = module3(x2)
    jax.block_until_ready(out3)
    loss3 = jax.block_until_ready(module3.loss)
    assert jnp.allclose(loss3, r2, rtol=5e-2), (loss3, r2)
    assert jnp.array_equal(out3, x2)

    print("KERNEL_OK")
</pallas_src>

<mosaic_0001>
module attributes {stable_mosaic.version = 11 : i64} {
  func.func @_gram_kernel(%arg0: i32, %arg1: i32, %arg2: memref<1xi32, #tpu.memory_space<smem>>, %arg3: memref<1xi32, #tpu.memory_space<smem>>, %arg4: memref<128x128xf32, #tpu.memory_space<vmem>>, %arg5: memref<128x128xf32, #tpu.memory_space<vmem>>, %arg6: memref<128x128xf32, #tpu.memory_space<vmem>>, %arg7: memref<128x128xf32, #tpu.memory_space<vmem>>) attributes {dimension_semantics = [#tpu.dimension_semantics<parallel>, #tpu.dimension_semantics<arbitrary>], iteration_bounds = array<i64: 1, 1>, scalar_prefetch = 2 : i64, scratch_operands = 1 : i64, tpu.core_type = #tpu.core_type<tc>, window_params = [{transform_indices = @transform_0, window_bounds = array<i64: 128, 128>}, {transform_indices = @transform_1, window_bounds = array<i64: 128, 128>}, {transform_indices = @transform_2, window_bounds = array<i64: 128, 128>}]} {
    %c0_i32 = arith.constant 0 : i32
    %0 = arith.cmpi eq, %arg1, %c0_i32 : i32
    %1 = arith.extui %0 : i1 to i32
    %c0_i32_0 = arith.constant 0 : i32
    %2 = arith.cmpi ne, %1, %c0_i32_0 : i32
    scf.if %2 {
      %cst_10 = arith.constant 0.000000e+00 : f32
      %12 = vector.broadcast %cst_10 : f32 to vector<128x128xf32>
      %c0_11 = arith.constant 0 : index
      %c0_12 = arith.constant 0 : index
      %13 = vector.load %arg7[%c0_11, %c0_12] : memref<128x128xf32, #tpu.memory_space<vmem>>, vector<128x128xf32>
      tpu.vector_store %arg7[%c0_11, %c0_12], %12 {strides = array<i32>} : memref<128x128xf32, #tpu.memory_space<vmem>>, vector<128x128xf32>,
    } else {
    }
    %c0 = arith.constant 0 : index
    %c0_1 = arith.constant 0 : index
    %3 = vector.load %arg7[%c0, %c0_1] : memref<128x128xf32, #tpu.memory_space<vmem>>, vector<128x128xf32>
    %c0_2 = arith.constant 0 : index
    %c0_3 = arith.constant 0 : index
    %4 = vector.load %arg4[%c0_2, %c0_3] : memref<128x128xf32, #tpu.memory_space<vmem>>, vector<128x128xf32>
    %c0_4 = arith.constant 0 : index
    %c0_5 = arith.constant 0 : index
    %5 = vector.load %arg5[%c0_4, %c0_5] : memref<128x128xf32, #tpu.memory_space<vmem>>, vector<128x128xf32>
    %cst = arith.constant dense<0.000000e+00> : vector<128x128xf32>
    %6 = tpu.matmul %4, %5, %cst {dimension_numbers = #tpu.dot_dimension_numbers<[1], [1], [0], [0], [0, 0, 1, 0], [], []>} : vector<128x128xf32>, vector<128x128xf32>, vector<128x128xf32> -> vector<128x128xf32>
    %7 = arith.addf %3, %6 : vector<128x128xf32>
    %c0_6 = arith.constant 0 : index
    %c0_7 = arith.constant 0 : index
    %8 = vector.load %arg7[%c0_6, %c0_7] : memref<128x128xf32, #tpu.memory_space<vmem>>, vector<128x128xf32>
    tpu.vector_store %arg7[%c0_6, %c0_7], %7 {strides = array<i32>} : memref<128x128xf32, #tpu.memory_space<vmem>>, vector<128x128xf32>,
    %c0_i32_8 = arith.constant 0 : i32
    %9 = arith.cmpi eq, %arg1, %c0_i32_8 : i32
    %10 = arith.extui %9 : i1 to i32
    %c0_i32_9 = arith.constant 0 : i32
    %11 = arith.cmpi ne, %10, %c0_i32_9 : i32
    scf.if %11 {
      %c0_10 = arith.constant 0 : index
      %c0_11 = arith.constant 0 : index
      %12 = vector.load %arg7[%c0_10, %c0_11] : memref<128x128xf32, #tpu.memory_space<vmem>>, vector<128x128xf32>
      %cst_12 = arith.constant 4.8828125E-4 : f32
      %13 = vector.broadcast %cst_12 : f32 to vector<128x128xf32>
      %14 = arith.mulf %12, %13 : vector<128x128xf32>
      %c0_13 = arith.constant 0 : index
      %c0_14 = arith.constant 0 : index
      %15 = vector.load %arg6[%c0_13, %c0_14] : memref<128x128xf32, #tpu.memory_space<vmem>>, vector<128x128xf32>
      tpu.vector_store %arg6[%c0_13, %c0_14], %14 {strides = array<i32>} : memref<128x128xf32, #tpu.memory_space<vmem>>, vector<128x128xf32>,
    } else {
    }
    return
  }
  func.func @transform_0(%arg0: i32, %arg1: i32, %arg2: memref<1xi32, #tpu.memory_space<smem>>, %arg3: memref<1xi32, #tpu.memory_space<smem>>) -> (i32, i32) {
    %0 = arith.index_cast %arg0 : i32 to index
    %1 = memref.load %arg2[%0] : memref<1xi32, #tpu.memory_space<smem>>
    %c0_i32 = arith.constant 0 : i32
    return %1, %arg1 : i32, i32
  }
  func.func @transform_1(%arg0: i32, %arg1: i32, %arg2: memref<1xi32, #tpu.memory_space<smem>>, %arg3: memref<1xi32, #tpu.memory_space<smem>>) -> (i32, i32) {
    %0 = arith.index_cast %arg0 : i32 to index
    %1 = memref.load %arg3[%0] : memref<1xi32, #tpu.memory_space<smem>>
    %c0_i32 = arith.constant 0 : i32
    return %1, %arg1 : i32, i32
  }
  func.func @transform_2(%arg0: i32, %arg1: i32, %arg2: memref<1xi32, #tpu.memory_space<smem>>, %arg3: memref<1xi32, #tpu.memory_space<smem>>) -> (i32, i32) {
    %0 = arith.index_cast %arg0 : i32 to index
    %1 = memref.load %arg2[%0] : memref<1xi32, #tpu.memory_space<smem>>
    %2 = arith.index_cast %arg0 : i32 to index
    %3 = memref.load %arg3[%2] : memref<1xi32, #tpu.memory_space<smem>>
    %c0_i32 = arith.constant 0 : i32
    return %1, %3 : i32, i32
  }
}

</mosaic_0001>

<llo_original>
// kernel: tpu_custom_call.1
$region0: #{tpu_custom_call.1}
  #allocation0 [shape = 'u32[]', space=smem, size = 0x4, offset = 0x4, fixed_abs, tag = 'smem constant byte address 0x4 - core index']
  #allocation1 [shape = 'u32[72,128]{1,0:T(1,128)}', space=vmem, size = 0x9000, scoped, tag = 'internal scratch']
  #allocation2 [shape = 'f32[128,128]{1,0:T(8,128)}', space=vmem, size = 0x10000, scoped, tag = 'scratch operand']
  #allocation3 [shape = 's32[1]{0}', space=sflag, size = 0x4, scoped, tag = 'scoped memory for tpu_custom_call.1']
  #allocation4 [shape = 's32[1]{0:T(128)S(6)}', space=smem, size = 0x200, scoped, tag = 'prefetched SMEM operand 0']
  #allocation5 [shape = 's32[1]{0:T(128)S(6)}', space=smem, size = 0x200, scoped, tag = 'prefetched SMEM operand 1']
  %s0 = inlined_call_operand.<no memory space> [shape: s32[1], index: 0, kind: input, shape index: {}]
  %s1 = inlined_call_operand.<no memory space> [shape: s32[1], index: 1, kind: input, shape index: {}]
  %s2 = inlined_call_operand.hbm [shape: f32[128,128], index: 2, kind: input, shape index: {}]
  %s3 = inlined_call_operand.hbm [shape: f32[128,128], index: 3, kind: input, shape index: {}]
  %s4 = inlined_call_operand.hbm [shape: f32[128,128], index: 4, kind: output, shape index: {}]
  %s5 = sld [smem:[#allocation0]]
  $region34: #{tpu_custom_call.1} parent=0
    _
  %s7 = ssub.s32 1, %s5
  %s8 = scalar_select 0, %s7, %s5
  %9 = sst [smem:[#allocation4]] %s0
  %10 = sst [smem:[#allocation5]] %s1
  $region1: #{tpu_custom_call.1} parent=0
    #allocation6 [shape = 'u8[65536]{0}', space=vmem, size = 0x10000, scoped, tag = 'input window, operand 2, single buffered']
    #allocation7 [shape = 's32[1]{0}', space=sflag, size = 0x4, scoped, tag = 'scoped memory for tpu_custom_call.1']
    #allocation8 [shape = 's32[1]{0}', space=sflag, size = 0x4, scoped, tag = 'scoped memory for tpu_custom_call.1']
    #allocation9 [shape = 'u8[65536]{0}', space=vmem, size = 0x10000, scoped, tag = 'input window, operand 3, single buffered']
    #allocation10 [shape = 's32[1]{0}', space=sflag, size = 0x4, scoped, tag = 'scoped memory for tpu_custom_call.1']
    #allocation11 [shape = 'u8[65536]{0}', space=vmem, size = 0x10000, scoped, tag = 'output window, operand 0, single buffered']
    %11 = vsyncpa [#allocation7], 0
    %12 = vsyncpa [#allocation10], 0
    %13 = vsyncpa [#allocation8], 0
    // Predicated region
    $region2: #{tpu_custom_call.1} parent=1 // pred_check
      _
    $region3: #{tpu_custom_call.1} parent=1 // pred_check_branch
      %15 = sbr.rel (0) target = $region5
    $region4: #{tpu_custom_call.1} parent=1 // pred_region
      %s16 = sld [smem:[#allocation4]]
      %s17 = smul.u32 16, %s16
      %19 = vsyncadd [#allocation7], 0
      %s20 = smul.addr %s17, 8
      %s21 = scalar_lea.hbm %s2, %s20
      %s22 = sshll.u32 %s21, 4
      %s23 = int_to_ptr.hbm [resolvable:$true] %s22
      %s24 = sshll.u32 [#allocation6], 4
      %s25 = int_to_ptr.vmem [resolvable:$true] %s24
      %30 = dma.hbm_to_vmem [thread:$0]  %s23, 2048, %s25, [#allocation7], 128, 128, 8
    $region5: #{tpu_custom_call.1} parent=1 // pred_fallthru
      _
    // Predicated region
    $region6: #{tpu_custom_call.1} parent=1 // pred_check
      _
    $region7: #{tpu_custom_call.1} parent=1 // pred_check_branch
      %32 = sbr.rel (0) target = $region9
    $region8: #{tpu_custom_call.1} parent=1 // pred_region
      %s33 = sld [smem:[#allocation5]]
      %s34 = smul.u32 16, %s33
      %36 = vsyncadd [#allocation10], 0
      %s37 = smul.addr %s34, 8
      %s38 = scalar_lea.hbm %s3, %s37
      %s39 = sshll.u32 %s38, 4
      %s40 = int_to_ptr.hbm [resolvable:$true] %s39
      %s41 = sshll.u32 [#allocation9], 4
      %s42 = int_to_ptr.vmem [resolvable:$true] %s41
      %47 = dma.hbm_to_vmem [thread:$0]  %s40, 2048, %s42, [#allocation10], 128, 128, 8
    $region9: #{tpu_custom_call.1} parent=1 // pred_fallthru
      _
    // Predicated region
    $region10: #{tpu_custom_call.1} parent=1 // pred_check
      _
    $region11: #{tpu_custom_call.1} parent=1 // pred_check_branch
      %49 = sbr.rel (0) target = $region13
    $region12: #{tpu_custom_call.1} parent=1 // pred_region
      %51 = dma.done [#allocation7], 2048
    $region13: #{tpu_custom_call.1} parent=1 // pred_fallthru
      _
    // Predicated region
    $region14: #{tpu_custom_call.1} parent=1 // pred_check
      _
    $region15: #{tpu_custom_call.1} parent=1 // pred_check_branch
      %53 = sbr.rel (0) target = $region17
    $region16: #{tpu_custom_call.1} parent=1 // pred_region
      %55 = dma.done [#allocation10], 2048
    $region17: #{tpu_custom_call.1} parent=1 // pred_fallthru
      _
    %s56 = sld [smem:[#allocation4]]
    %s57 = smul.u32 16, %s56
    %s58 = sld [smem:[#allocation5]]
    %s59 = smul.u32 16, %s58
    %s60 = sld [smem:[#allocation4]]
    %s61 = sld [smem:[#allocation5]]
    %s62 = smul.u32 16, %s60
    %p63 = scmp.eq.s32.totalorder 0, 0
    // Predicated region
    $region18: #{tpu_custom_call.1} parent=1 // pred_check
      %p64 = pneg %p63
    $region19: #{tpu_custom_call.1} parent=1 // pred_check_branch
      %66 = sbr.rel (%p64) target = $region21
    $region20: #{tpu_custom_call.1} parent=1 // pred_region
      %67 = vst [vmem:[#allocation2] sm:$0xff] 0.0
      %68 = vst [vmem:[#allocation2 + $0x8] sm:$0xff] 0.0
      %69 = vst [vmem:[#allocation2 + $0x10] sm:$0xff] 0.0
      %70 = vst [vmem:[#allocation2 + $0x18] sm:$0xff] 0.0
      %71 = vst [vmem:[#allocation2 + $0x20] sm:$0xff] 0.0
      %72 = vst [vmem:[#allocation2 + $0x28] sm:$0xff] 0.0
      %73 = vst [vmem:[#allocation2 + $0x30] sm:$0xff] 0.0
      %74 = vst [vmem:[#allocation2 + $0x38] sm:$0xff] 0.0
      %75 = vst [vmem:[#allocation2 + $0x40] sm:$0xff] 0.0
      %76 = vst [vmem:[#allocation2 + $0x48] sm:$0xff] 0.0
      %77 = vst [vmem:[#allocation2 + $0x50] sm:$0xff] 0.0
      %78 = vst [vmem:[#allocation2 + $0x58] sm:$0xff] 0.0
      %79 = vst [vmem:[#allocation2 + $0x60] sm:$0xff] 0.0
      %80 = vst [vmem:[#allocation2 + $0x68] sm:$0xff] 0.0
      %81 = vst [vmem:[#allocation2 + $0x70] sm:$0xff] 0.0
      %82 = vst [vmem:[#allocation2 + $0x78] sm:$0xff] 0.0
    $region21: #{tpu_custom_call.1} parent=1 // pred_fallthru
      _
    %v83 = vld [vmem:[#allocation2] sm:$0xff]
    %v84 = vld [vmem:[#allocation2 + $0x8] sm:$0xff]
    %v85 = vld [vmem:[#allocation2 + $0x10] sm:$0xff]
    %v86 = vld [vmem:[#allocation2 + $0x18] sm:$0xff]
    %v87 = vld [vmem:[#allocation2 + $0x20] sm:$0xff]
    %v88 = vld [vmem:[#allocation2 + $0x28] sm:$0xff]
    %v89 = vld [vmem:[#allocation2 + $0x30] sm:$0xff]
    %v90 = vld [vmem:[#allocation2 + $0x38] sm:$0xff]
    %v91 = vld [vmem:[#allocation2 + $0x40] sm:$0xff]
    %v92 = vld [vmem:[#allocation2 + $0x48] sm:$0xff]
    %v93 = vld [vmem:[#allocation2 + $0x50] sm:$0xff]
    %v94 = vld [vmem:[#allocation2 + $0x58] sm:$0xff]
    %v95 = vld [vmem:[#allocation2 + $0x60] sm:$0xff]
    %v96 = vld [vmem:[#allocation2 + $0x68] sm:$0xff]
    %v97 = vld [vmem:[#allocation2 + $0x70] sm:$0xff]
    %v98 = vld [vmem:[#allocation2 + $0x78] sm:$0xff]
    %v99 = vld [vmem:[#allocation6] sm:$0xff]
    %v100 = vld [vmem:[#allocation6 + $0x8] sm:$0xff]
    %v101 = vld [vmem:[#allocation6 + $0x10] sm:$0xff]
    %v102 = vld [vmem:[#allocation6 + $0x18] sm:$0xff]
    %v103 = vld [vmem:[#allocation6 + $0x20] sm:$0xff]
    %v104 = vld [vmem:[#allocation6 + $0x28] sm:$0xff]
    %v105 = vld [vmem:[#allocation6 + $0x30] sm:$0xff]
    %v106 = vld [vmem:[#allocation6 + $0x38] sm:$0xff]
    %v107 = vld [vmem:[#allocation6 + $0x40] sm:$0xff]
    %v108 = vld [vmem:[#allocation6 + $0x48] sm:$0xff]
    %v109 = vld [vmem:[#allocation6 + $0x50] sm:$0xff]
    %v110 = vld [vmem:[#allocation6 + $0x58] sm:$0xff]
    %v111 = vld [vmem:[#allocation6 + $0x60] sm:$0xff]
    %v112 = vld [vmem:[#allocation6 + $0x68] sm:$0xff]
    %v113 = vld [vmem:[#allocation6 + $0x70] sm:$0xff]
    %v114 = vld [vmem:[#allocation6 + $0x78] sm:$0xff]
    %v115 = vld [vmem:[#allocation9] sm:$0xff]
    %v116 = vld [vmem:[#allocation9 + $0x8] sm:$0xff]
    %v117 = vld [vmem:[#allocation9 + $0x10] sm:$0xff]
    %v118 = vld [vmem:[#allocation9 + $0x18] sm:$0xff]
    %v119 = vld [vmem:[#allocation9 + $0x20] sm:$0xff]
    %v120 = vld [vmem:[#allocation9 + $0x28] sm:$0xff]
    %v121 = vld [vmem:[#allocation9 + $0x30] sm:$0xff]
    %v122 = vld [vmem:[#allocation9 + $0x38] sm:$0xff]
    %v123 = vld [vmem:[#allocation9 + $0x40] sm:$0xff]
    %v124 = vld [vmem:[#allocation9 + $0x48] sm:$0xff]
    %v125 = vld [vmem:[#allocation9 + $0x50] sm:$0xff]
    %v126 = vld [vmem:[#allocation9 + $0x58] sm:$0xff]
    %v127 = vld [vmem:[#allocation9 + $0x60] sm:$0xff]
    %v128 = vld [vmem:[#allocation9 + $0x68] sm:$0xff]
    %v129 = vld [vmem:[#allocation9 + $0x70] sm:$0xff]
    %v130 = vld [vmem:[#allocation9 + $0x78] sm:$0xff]
    %131 = vmatpush.xpose.msra.mxu0 %v130
    %132 = vmatpush.xpose.msra.mxu0 %v129
    %133 = vmatpush.xpose.msra.mxu0 %v128
    %134 = vmatpush.xpose.msra.mxu0 %v127
    %135 = vmatpush.xpose.msra.mxu0 %v126
    %136 = vmatpush.xpose.msra.mxu0 %v125
    %137 = vmatpush.xpose.msra.mxu0 %v124
    %138 = vmatpush.xpose.msra.mxu0 %v123
    %139 = vmatpush.xpose.msra.mxu0 %v122
    %140 = vmatpush.xpose.msra.mxu0 %v121
    %141 = vmatpush.xpose.msra.mxu0 %v120
    %142 = vmatpush.xpose.msra.mxu0 %v119
    %143 = vmatpush.xpose.msra.mxu0 %v118
    %144 = vmatpush.xpose.msra.mxu0 %v117
    %145 = vmatpush.xpose.msra.mxu0 %v116
    %146 = vmatpush.xpose.msra.mxu0 %v115
    %147 = vmatmul.f32.gmra.mxu0 %v99
    %v148 = vpop.f32.mrf.mxu0
    %v149 = vadd.f32 0.0, %v148
    %150 = vmatmul.f32.gmra.mxu0 %v100
    %v151 = vpop.f32.mrf.mxu0
    %v152 = vadd.f32 0.0, %v151
    %153 = vmatmul.f32.gmra.mxu0 %v101
    %v154 = vpop.f32.mrf.mxu0
    %v155 = vadd.f32 0.0, %v154
    %156 = vmatmul.f32.gmra.mxu0 %v102
    %v157 = vpop.f32.mrf.mxu0
    %v158 = vadd.f32 0.0, %v157
    %159 = vmatmul.f32.gmra.mxu0 %v103
    %v160 = vpop.f32.mrf.mxu0
    %v161 = vadd.f32 0.0, %v160
    %162 = vmatmul.f32.gmra.mxu0 %v104
    %v163 = vpop.f32.mrf.mxu0
    %v164 = vadd.f32 0.0, %v163
    %165 = vmatmul.f32.gmra.mxu0 %v105
    %v166 = vpop.f32.mrf.mxu0
    %v167 = vadd.f32 0.0, %v166
    %168 = vmatmul.f32.gmra.mxu0 %v106
    %v169 = vpop.f32.mrf.mxu0
    %v170 = vadd.f32 0.0, %v169
    %171 = vmatmul.f32.gmra.mxu0 %v107
    %v172 = vpop.f32.mrf.mxu0
    %v173 = vadd.f32 0.0, %v172
    %174 = vmatmul.f32.gmra.mxu0 %v108
    %v175 = vpop.f32.mrf.mxu0
    %v176 = vadd.f32 0.0, %v175
    %177 = vmatmul.f32.gmra.mxu0 %v109
    %v178 = vpop.f32.mrf.mxu0
    %v179 = vadd.f32 0.0, %v178
    %180 = vmatmul.f32.gmra.mxu0 %v110
    %v181 = vpop.f32.mrf.mxu0
    %v182 = vadd.f32 0.0, %v181
    %183 = vmatmul.f32.gmra.mxu0 %v111
    %v184 = vpop.f32.mrf.mxu0
    %v185 = vadd.f32 0.0, %v184
    %186 = vmatmul.f32.gmra.mxu0 %v112
    %v187 = vpop.f32.mrf.mxu0
    %v188 = vadd.f32 0.0, %v187
    %189 = vmatmul.f32.gmra.mxu0 %v113
    %v190 = vpop.f32.mrf.mxu0
    %v191 = vadd.f32 0.0, %v190
    %192 = vmatmul.f32.gmra.mxu0 %v114
    %v193 = vpop.f32.mrf.mxu0
    %v194 = vadd.f32 0.0, %v193
    %195 = vdwg.mxu0
    %v196 = vadd.f32 %v83, %v149
    %v197 = vadd.f32 %v84, %v152
    %v198 = vadd.f32 %v85, %v155
    %v199 = vadd.f32 %v86, %v158
    %v200 = vadd.f32 %v87, %v161
    %v201 = vadd.f32 %v88, %v164
    %v202 = vadd.f32 %v89, %v167
    %v203 = vadd.f32 %v90, %v170
    %v204 = vadd.f32 %v91, %v173
    %v205 = vadd.f32 %v92, %v176
    %v206 = vadd.f32 %v93, %v179
    %v207 = vadd.f32 %v94, %v182
    %v208 = vadd.f32 %v95, %v185
    %v209 = vadd.f32 %v96, %v188
    %v210 = vadd.f32 %v97, %v191
    %v211 = vadd.f32 %v98, %v194
    %212 = vst [vmem:[#allocation2] sm:$0xff] %v196
    %213 = vst [vmem:[#allocation2 + $0x8] sm:$0xff] %v197
    %214 = vst [vmem:[#allocation2 + $0x10] sm:$0xff] %v198
    %215 = vst [vmem:[#allocation2 + $0x18] sm:$0xff] %v199
    %216 = vst [vmem:[#allocation2 + $0x20] sm:$0xff] %v200
    %217 = vst [vmem:[#allocation2 + $0x28] sm:$0xff] %v201
    %218 = vst [vmem:[#allocation2 + $0x30] sm:$0xff] %v202
    %219 = vst [vmem:[#allocation2 + $0x38] sm:$0xff] %v203
    %220 = vst [vmem:[#allocation2 + $0x40] sm:$0xff] %v204
    %221 = vst [vmem:[#allocation2 + $0x48] sm:$0xff] %v205
    %222 = vst [vmem:[#allocation2 + $0x50] sm:$0xff] %v206
    %223 = vst [vmem:[#allocation2 + $0x58] sm:$0xff] %v207
    %224 = vst [vmem:[#allocation2 + $0x60] sm:$0xff] %v208
    %225 = vst [vmem:[#allocation2 + $0x68] sm:$0xff] %v209
    %226 = vst [vmem:[#allocation2 + $0x70] sm:$0xff] %v210
    %227 = vst [vmem:[#allocation2 + $0x78] sm:$0xff] %v211
    // Predicated region
    $region22: #{tpu_custom_call.1} parent=1 // pred_check
      %p228 = pneg %p63
    $region23: #{tpu_custom_call.1} parent=1 // pred_check_branch
      %230 = sbr.rel (%p228) target = $region25
    $region24: #{tpu_custom_call.1} parent=1 // pred_region
      %v231 = vld [vmem:[#allocation2] sm:$0xff]
      %v232 = vld [vmem:[#allocation2 + $0x8] sm:$0xff]
      %v233 = vld [vmem:[#allocation2 + $0x10] sm:$0xff]
      %v234 = vld [vmem:[#allocation2 + $0x18] sm:$0xff]
      %v235 = vld [vmem:[#allocation2 + $0x20] sm:$0xff]
      %v236 = vld [vmem:[#allocation2 + $0x28] sm:$0xff]
      %v237 = vld [vmem:[#allocation2 + $0x30] sm:$0xff]
      %v238 = vld [vmem:[#allocation2 + $0x38] sm:$0xff]
      %v239 = vld [vmem:[#allocation2 + $0x40] sm:$0xff]
      %v240 = vld [vmem:[#allocation2 + $0x48] sm:$0xff]
      %v241 = vld [vmem:[#allocation2 + $0x50] sm:$0xff]
      %v242 = vld [vmem:[#allocation2 + $0x58] sm:$0xff]
      %v243 = vld [vmem:[#allocation2 + $0x60] sm:$0xff]
      %v244 = vld [vmem:[#allocation2 + $0x68] sm:$0xff]
      %v245 = vld [vmem:[#allocation2 + $0x70] sm:$0xff]
      %v246 = vld [vmem:[#allocation2 + $0x78] sm:$0xff]
      %v247 = vmul.f32 %v231, 0.00048828125
      %v248 = vmul.f32 %v232, 0.00048828125
      %v249 = vmul.f32 %v233, 0.00048828125
      %v250 = vmul.f32 %v234, 0.00048828125
      %v251 = vmul.f32 %v235, 0.00048828125
      %v252 = vmul.f32 %v236, 0.00048828125
      %v253 = vmul.f32 %v237, 0.00048828125
      %v254 = vmul.f32 %v238, 0.00048828125
      %v255 = vmul.f32 %v239, 0.00048828125
      %v256 = vmul.f32 %v240, 0.00048828125
      %v257 = vmul.f32 %v241, 0.00048828125
      %v258 = vmul.f32 %v242, 0.00048828125
      %v259 = vmul.f32 %v243, 0.00048828125
      %v260 = vmul.f32 %v244, 0.00048828125
      %v261 = vmul.f32 %v245, 0.00048828125
      %v262 = vmul.f32 %v246, 0.00048828125
      %263 = vst [vmem:[#allocation11] sm:$0xff] %v247
      %264 = vst [vmem:[#allocation11 + $0x8] sm:$0xff] %v248
      %265 = vst [vmem:[#allocation11 + $0x10] sm:$0xff] %v249
      %266 = vst [vmem:[#allocation11 + $0x18] sm:$0xff] %v250
      %267 = vst [vmem:[#allocation11 + $0x20] sm:$0xff] %v251
      %268 = vst [vmem:[#allocation11 + $0x28] sm:$0xff] %v252
      %269 = vst [vmem:[#allocation11 + $0x30] sm:$0xff] %v253
      %270 = vst [vmem:[#allocation11 + $0x38] sm:$0xff] %v254
      %271 = vst [vmem:[#allocation11 + $0x40] sm:$0xff] %v255
      %272 = vst [vmem:[#allocation11 + $0x48] sm:$0xff] %v256
      %273 = vst [vmem:[#allocation11 + $0x50] sm:$0xff] %v257
      %274 = vst [vmem:[#allocation11 + $0x58] sm:$0xff] %v258
      %275 = vst [vmem:[#allocation11 + $0x60] sm:$0xff] %v259
      %276 = vst [vmem:[#allocation11 + $0x68] sm:$0xff] %v260
      %277 = vst [vmem:[#allocation11 + $0x70] sm:$0xff] %v261
      %278 = vst [vmem:[#allocation11 + $0x78] sm:$0xff] %v262
    $region25: #{tpu_custom_call.1} parent=1 // pred_fallthru
      _
    // Predicated region
    $region26: #{tpu_custom_call.1} parent=1 // pred_check
      _
    $region27: #{tpu_custom_call.1} parent=1 // pred_check_branch
      %280 = sbr.rel (0) target = $region29
    $region28: #{tpu_custom_call.1} parent=1 // pred_region
      %s281 = sld [smem:[#allocation4]]
      %s282 = sld [smem:[#allocation5]]
      %s283 = smul.u32 16, %s281
      %285 = vsyncadd [#allocation8], 0
      %s286 = sadd.s32 %s282, %s283
      %s287 = smul.addr %s286, 8
      %s288 = scalar_lea.hbm %s4, %s287
      %s289 = sshll.u32 [#allocation11], 4
      %s290 = int_to_ptr.vmem [resolvable:$true] %s289
      %s291 = sshll.u32 %s288, 4
      %s292 = int_to_ptr.hbm [resolvable:$true] %s291
      %297 = dma.vmem_to_hbm [thread:$0]  %s290, 2048, %s292, [#allocation8], 128, 128, 8
    $region29: #{tpu_custom_call.1} parent=1 // pred_fallthru
      _
    // Predicated region
    $region30: #{tpu_custom_call.1} parent=1 // pred_check
      _
    $region31: #{tpu_custom_call.1} parent=1 // pred_check_branch
      %299 = sbr.rel (0) target = $region33
    $region32: #{tpu_custom_call.1} parent=1 // pred_region
      %301 = dma.done [#allocation8], 2048
    $region33: #{tpu_custom_call.1} parent=1 // pred_fallthru
      _
    %302 = vsyncpa [#allocation7], 1
    %303 = vsyncpa [#allocation10], 1
    %304 = vsyncpa [#allocation8], 1

</llo_original>
